<compile_context>
chip_gen: v6e
topology: v6e:2x2x1
jax: 0.10.0
libtpu: 0.0.40
codegen_flags: <defaults>
</compile_context>

<pallas_src>
import functools
import math

import jax
import jax.numpy as jnp
import numpy as np
from jax.experimental import pallas as pl
from jax.experimental.pallas import tpu as pltpu


def _cdiv(a, b):
    return -(-a // b)


def _round_up8(x):
    return ((x + 7) // 8) * 8


def _fourier_time_kernel(t_ref, p_ref, out_ref, *, k, d, all_fourier, masked_sum):
    """One row-tile of the packed encoding.

    t_ref   : (TR, k)  k batch elements packed per stored row.
    p_ref   : (P, W)   primary path:  row 0 = a tiled, row 1 = c tiled,
                                       row 2 = fourier mask (absent if all_fourier)
                       fallback path: rows 0..k-1 = E (E[i, i*d+j] = a_j),
                                      row k = c tiled, row k+1 = mask
    out_ref : (TR, W)  W = k*d (lane-dense when 128 % d == 0).
    """
    tr = t_ref.shape[0]
    w = out_ref.shape[1]
    t = t_ref[...]                                     # (TR, k) f32

    if masked_sum:
        # v2 fallback: exact zero-padded scatter+scale sum (2k VALU ops/elem).
        val = p_ref[k:k + 1, :]
        for i in range(k):                             # unrolled at trace time
            val = val + t[:, i:i + 1] * p_ref[i:i + 1, :]
        m_row = k + 1
    else:
        # Primary path: replicate each packed t lane across its d columns with
        # lane-broadcasts + a lane-concatenate (layout/XLU work, ~free on the
        # VALU), then a single multiply + add against the resident params.
        if k == 1:
            t_rep = jnp.broadcast_to(t, (tr, w))
        else:
            pieces = [jnp.broadcast_to(t[:, i:i + 1], (tr, d)) for i in range(k)]
            t_rep = jnp.concatenate(pieces, axis=-1)   # (TR, W)
        val = t_rep * p_ref[0:1, :] + p_ref[1:2, :]
        m_row = 2

    s = jnp.sin(val)                                   # VALU polynomial (no EUP sin)
    if all_fourier:
        out = s
    else:
        # Compare on the (1, W) mask row only (once per tile); the select is
        # the only per-element cost of the linear columns.
        keep = p_ref[m_row:m_row + 1, :] > 0.5
        out = jnp.where(keep, s, val)
    out_ref[...] = out.astype(out_ref.dtype)


def fourier_time_encoding(t, a_cols, c_cols, mask_cols, *,
                          out_dtype=jnp.float32,
                          all_fourier=None,
                          masked_sum_fallback=False,
                          target_block_bytes=4 * 1024 * 1024,
                          single_block_bytes=1 * 1024 * 1024,
                          vmem_limit_bytes=32 * 1024 * 1024):
    """Pallas forward of FourierTimeEncoding.

    t         : (B,) or (B, 1) times.
    a_cols    : (1, D) per-column scale  (2*pi*f for fourier cols, w for linear)
    c_cols    : (1, D) per-column offset (phase / phase+pi/2 / bias)
    mask_cols : (1, D) 1.0 for fourier (sin) columns, 0.0 for linear columns.
    Returns (B, D) encoding.
    """
    t = jnp.asarray(t, jnp.float32).reshape(-1)
    B = int(t.shape[0])
    D = int(a_cols.shape[-1])
    a = jnp.asarray(a_cols, jnp.float32).reshape(1, D)
    c = jnp.asarray(c_cols, jnp.float32).reshape(1, D)
    m = jnp.asarray(mask_cols, jnp.float32).reshape(1, D)

    if all_fourier is None:
        try:   # concrete mask -> decide statically; under jit tracing keep select
            all_fourier = bool(np.all(np.asarray(mask_cols) > 0.5))
        except Exception:
            all_fourier = False
    all_fourier = bool(all_fourier)
    use_masked_sum = bool(masked_sum_fallback)

    # Lane packing factor: k batch rows per stored output row so W = k*D is a
    # multiple of 128 (unmasked vst).  k = 1 fallback stays correct for
    # awkward D (last block dim then equals the full array dim).
    k = 128 // D if (D < 128 and 128 % D == 0) else 1
    W = k * D
    rows = _cdiv(B, k)
    pad = rows * k - B                       # < k; only when B % k != 0
    if pad:
        t = jnp.pad(t, (0, pad))             # tiny (pads < k scalars)
    t_packed = t.reshape(rows, k)

    # --- tiling ---------------------------------------------------------
    out_row_bytes = W * jnp.dtype(out_dtype).itemsize
    total_out_bytes = rows * out_row_bytes
    if total_out_bytes <= single_block_bytes:
        # Small problem: one full-extent block, zero grid-step overhead
        # (single-TC v5e/v6e gain nothing from splitting).
        tile_rows, grid_rows = rows, 1
    else:
        tile_rows = max(8, (target_block_bytes // out_row_bytes) // 8 * 8)
        # VMEM accounting: double-buffered out tile + lane-padded t tile
        # (a (tile, k) f32 block costs tile*128*4 bytes in VMEM).
        vmem_budget = (vmem_limit_bytes * 3) // 4
        cap = max(8, (vmem_budget // (2 * (out_row_bytes + 128 * 4))) // 8 * 8)
        tile_rows = min(tile_rows, cap)
        # In the big regime, at least 2 steps so v7x can shard across its 2 TCs.
        tile_rows = min(tile_rows, max(8, _round_up8(_cdiv(rows, 2))))
        grid_rows = _cdiv(rows, tile_rows)
        # v7x: keep the parallel grid even so both TensorCores stay balanced.
        tries = 0
        while grid_rows > 1 and grid_rows % 2 == 1 and tries < 4:
            tile_rows = max(8, _round_up8(_cdiv(rows, grid_rows + 1)))
            grid_rows = _cdiv(rows, tile_rows)
            tries += 1

    # --- static per-column params, packed once per call (tiny XLA ops) ---
    a_tiled = jnp.tile(a, (1, k))
    c_tiled = jnp.tile(c, (1, k))
    if use_masked_sum:
        group = jnp.arange(W, dtype=jnp.int32)[None, :] // D
        e_mat = jnp.where(group == jnp.arange(k, dtype=jnp.int32)[:, None],
                          a_tiled, 0.0)                    # (k, W)
        rows_list = [e_mat, c_tiled]
    else:
        rows_list = [a_tiled, c_tiled]
    if not all_fourier:
        rows_list.append(jnp.tile(m, (1, k)))
    params = jnp.concatenate(rows_list, axis=0)
    P = int(params.shape[0])

    kernel = functools.partial(_fourier_time_kernel, k=k, d=D,
                               all_fourier=all_fourier,
                               masked_sum=use_masked_sum)

    out_packed = pl.pallas_call(
        kernel,
        out_shape=jax.ShapeDtypeStruct((rows, W), out_dtype),
        grid_spec=pltpu.PrefetchScalarGridSpec(
            num_scalar_prefetch=0,
            grid=(grid_rows,),
            in_specs=[
                pl.BlockSpec((tile_rows, k), lambda i: (i, 0)),
                # Full-array resident block, constant index -> loaded once.
                pl.BlockSpec((P, W), lambda i: (0, 0)),
            ],
            # Partial final block (when tile_rows doesn't divide rows): Pallas
            # drops the out-of-bounds writes, so no row padding / no big slice.
            out_specs=pl.BlockSpec((tile_rows, W), lambda i: (i, 0)),
        ),
        compiler_params=pltpu.CompilerParams(
            dimension_semantics=("parallel",),
            vmem_limit_bytes=vmem_limit_bytes,
        ),
    )(t_packed, params)

    # (rows, k*D) -> (rows*k, D) is a free row-major reshape.
    out = out_packed.reshape(rows * k, D)
    if pad:
        # Only when B % k != 0: trims < k extra rows.  Inside a jit this
        # fuses into the consumer; pad B to a multiple of k to avoid it.
        out = out[:B]
    return out


def build_fourier_params(dimension, num_frequencies=None, base_freq=0.1,
                         max_freq=None, key=None):
    """Deterministic parameter setup mirroring FourierTimeEncoding.__init__
    (learnable=True path). Returns column-packed a/c/mask plus raw params."""
    if num_frequencies is None:
        num_frequencies = dimension // 2
    if max_freq is None:
        max_freq = 100.0 * base_freq
    F = num_frequencies
    if dimension < 2 * F:
        F = dimension // 2
    R = dimension - 2 * F
    D = 2 * F + R

    freqs = np.exp(np.linspace(math.log(base_freq), math.log(max_freq), F)).astype(np.float32)
    phases = np.zeros((F,), np.float32)

    a = np.zeros((1, D), np.float32)
    c = np.zeros((1, D), np.float32)
    m = np.zeros((1, D), np.float32)
    a[0, 0:2 * F:2] = 2.0 * np.pi * freqs
    a[0, 1:2 * F:2] = 2.0 * np.pi * freqs
    c[0, 0:2 * F:2] = phases
    c[0, 1:2 * F:2] = phases + np.pi / 2.0   # cos(x) == sin(x + pi/2)
    m[0, :2 * F] = 1.0

    w = None
    b = None
    if R > 0:
        # nn.Linear(1, R) with xavier_uniform weight, zero bias
        bound = math.sqrt(6.0 / (1 + R))
        w = np.asarray(jax.random.uniform(key, (R, 1), jnp.float32, -bound, bound))
        b = np.zeros((R,), np.float32)
        a[0, 2 * F:] = w[:, 0]
        c[0, 2 * F:] = b

    return (jnp.asarray(a), jnp.asarray(c), jnp.asarray(m),
            jnp.asarray(freqs), jnp.asarray(phases),
            None if w is None else jnp.asarray(w),
            None if b is None else jnp.asarray(b))


def reference_forward(t, freqs, phases, w, b):
    """Plain-JAX transcription of FourierTimeEncoding.forward for checking."""
    t = t.astype(jnp.float32)
    if t.ndim == 1:
        t = t.reshape(-1, 1)
    B = t.shape[0]
    F = freqs.shape[0]
    angles = 2.0 * math.pi * freqs[None, :] * t + phases[None, :]
    sin_vals = jnp.sin(angles)
    cos_vals = jnp.cos(angles)
    ff = jnp.zeros((B, 2 * F), jnp.float32)
    ff = ff.at[:, 0::2].set(sin_vals).at[:, 1::2].set(cos_vals)
    if w is not None:
        lin = t @ w.T + b[None, :]
        return jnp.concatenate([ff, lin], axis=1)
    return ff


if __name__ == "__main__":
    key = jax.random.PRNGKey(0)
    k_w, k_t1, k_t2, k_t3 = jax.random.split(key, 4)

    # Config A: dimension=32 (24 fourier + 8 linear), batch=100.  Lane-packs
    # k=4 rows per 128-lane output row; small problem -> single full-extent
    # block; B % k == 0 so no output slice.
    dim1, nfreq1, batch1 = 32, 12, 100
    a1, c1, m1, f1, p1, w1, b1 = build_fourier_params(
        dim1, nfreq1, base_freq=0.1, max_freq=None, key=k_w)
    t1 = jax.random.uniform(k_t1, (batch1,), jnp.float32) * 5.0
    out1 = jax.block_until_ready(fourier_time_encoding(t1, a1, c1, m1))
    ref1 = reference_forward(t1, f1, p1, w1, b1)
    assert out1.shape == (batch1, dim1), out1.shape
    assert np.allclose(np.asarray(out1), np.asarray(ref1), atol=3e-4, rtol=3e-4), (
        np.max(np.abs(np.asarray(out1) - np.asarray(ref1))))

    # Config A2: same inputs through the masked-sum fallback path.
    out1b = jax.block_until_ready(
        fourier_time_encoding(t1, a1, c1, m1, masked_sum_fallback=True))
    assert np.allclose(np.asarray(out1b), np.asarray(ref1), atol=3e-4, rtol=3e-4), (
        np.max(np.abs(np.asarray(out1b) - np.asarray(ref1))))

    # Config B: dimension=128 (all fourier) -> static all_fourier path (no
    # select, 2-row params); k=1 already lane-dense.
    dim2, batch2 = 128, 48
    a2, c2, m2, f2, p2, w2, b2 = build_fourier_params(
        dim2, None, base_freq=0.1, max_freq=None, key=k_w)
    t2 = jax.random.uniform(k_t2, (batch2,), jnp.float32) * 5.0
    out2 = jax.block_until_ready(fourier_time_encoding(t2, a2, c2, m2))
    ref2 = reference_forward(t2, f2, p2, w2, b2)
    assert out2.shape == (batch2, dim2), out2.shape
    assert np.allclose(np.asarray(out2), np.asarray(ref2), atol=3e-4, rtol=3e-4), (
        np.max(np.abs(np.asarray(out2) - np.asarray(ref2))))

    # Config C: dimension=32, batch=1001 (ragged).  Small thresholds passed
    # only to force the multi-block path at demo sizes: even 2-step "parallel"
    # grid, partial final output block (no row padding), plus the tiny
    # residual [:B] slice since B % k != 0.
    batch3 = 1001
    t3 = jax.random.uniform(k_t3, (batch3,), jnp.float32) * 5.0
    out3 = jax.block_until_ready(
        fourier_time_encoding(t3, a1, c1, m1,
                              target_block_bytes=64 * 1024,
                              single_block_bytes=32 * 1024))
    ref3 = reference_forward(t3, f1, p1, w1, b1)
    assert out3.shape == (batch3, dim1), out3.shape
    assert np.allclose(np.asarray(out3), np.asarray(ref3), atol=3e-4, rtol=3e-4), (
        np.max(np.abs(np.asarray(out3) - np.asarray(ref3))))

    print("KERNEL_OK")
</pallas_src>

<mosaic_0001>
module attributes {stable_mosaic.version = 11 : i64} {
  func.func @_fourier_time_kernel(%arg0: i32, %arg1: memref<25x4xf32, #tpu.memory_space<vmem>>, %arg2: memref<3x128xf32, #tpu.memory_space<vmem>>, %arg3: memref<25x128xf32, #tpu.memory_space<vmem>>) attributes {dimension_semantics = [#tpu.dimension_semantics<parallel>], iteration_bounds = array<i64: 1>, scalar_prefetch = 0 : i64, scratch_operands = 0 : i64, tpu.core_type = #tpu.core_type<tc>, window_params = [{transform_indices = @transform_0, window_bounds = array<i64: 25, 4>}, {pipeline_mode = #tpu.pipeline_mode<synchronous>, transform_indices = @transform_1, window_bounds = array<i64: 3, 128>}, {transform_indices = @transform_2, window_bounds = array<i64: 25, 128>}]} {
    %c0 = arith.constant 0 : index
    %c0_0 = arith.constant 0 : index
    %0 = vector.load %arg1[%c0, %c0_0] : memref<25x4xf32, #tpu.memory_space<vmem>>, vector<25x4xf32>
    %1 = vector.extract_strided_slice %0 {offsets = [0, 0], sizes = [25, 1], strides = [1, 1]} : vector<25x4xf32> to vector<25x1xf32>
    %2 = vector.shape_cast %1 : vector<25x1xf32> to vector<25x1xf32>
    %3 = vector.broadcast %2 : vector<25x1xf32> to vector<25x32xf32>
    %4 = vector.extract_strided_slice %0 {offsets = [0, 1], sizes = [25, 1], strides = [1, 1]} : vector<25x4xf32> to vector<25x1xf32>
    %5 = vector.shape_cast %4 : vector<25x1xf32> to vector<25x1xf32>
    %6 = vector.broadcast %5 : vector<25x1xf32> to vector<25x32xf32>
    %7 = vector.extract_strided_slice %0 {offsets = [0, 2], sizes = [25, 1], strides = [1, 1]} : vector<25x4xf32> to vector<25x1xf32>
    %8 = vector.shape_cast %7 : vector<25x1xf32> to vector<25x1xf32>
    %9 = vector.broadcast %8 : vector<25x1xf32> to vector<25x32xf32>
    %10 = vector.extract_strided_slice %0 {offsets = [0, 3], sizes = [25, 1], strides = [1, 1]} : vector<25x4xf32> to vector<25x1xf32>
    %11 = vector.shape_cast %10 : vector<25x1xf32> to vector<25x1xf32>
    %12 = vector.broadcast %11 : vector<25x1xf32> to vector<25x32xf32>
    %13 = tpu.concatenate %3, %6, %9, %12 in 1 : vector<25x32xf32>, vector<25x32xf32>, vector<25x32xf32>, vector<25x32xf32> -> vector<25x128xf32>
    %c0_1 = arith.constant 0 : index
    %c0_2 = arith.constant 0 : index
    %14 = vector.load %arg2[%c0_1, %c0_2] : memref<3x128xf32, #tpu.memory_space<vmem>>, vector<1x128xf32>
    %15 = vector.broadcast %14 : vector<1x128xf32> to vector<25x128xf32>
    %16 = arith.mulf %13, %15 : vector<25x128xf32>
    %c1 = arith.constant 1 : index
    %c0_3 = arith.constant 0 : index
    %17 = vector.load %arg2[%c1, %c0_3] : memref<3x128xf32, #tpu.memory_space<vmem>>, vector<1x128xf32>
    %18 = vector.broadcast %17 : vector<1x128xf32> to vector<25x128xf32>
    %19 = arith.addf %16, %18 : vector<25x128xf32>
    %20 = math.sin %19 : vector<25x128xf32>
    %c2 = arith.constant 2 : index
    %c0_4 = arith.constant 0 : index
    %21 = vector.load %arg2[%c2, %c0_4] : memref<3x128xf32, #tpu.memory_space<vmem>>, vector<1x128xf32>
    %cst = arith.constant 5.000000e-01 : f32
    %22 = vector.broadcast %cst : f32 to vector<1x128xf32>
    %23 = arith.cmpf ogt, %21, %22 : vector<1x128xf32>
    %24 = vector.shape_cast %23 : vector<1x128xi1> to vector<1x128xi1>
    %25 = vector.broadcast %24 : vector<1x128xi1> to vector<25x128xi1>
    %26 = arith.select %25, %20, %19 : vector<25x128xi1>, vector<25x128xf32>
    %c0_5 = arith.constant 0 : index
    %c0_6 = arith.constant 0 : index
    %27 = vector.load %arg3[%c0_5, %c0_6] : memref<25x128xf32, #tpu.memory_space<vmem>>, vector<25x128xf32>
    tpu.vector_store %arg3[%c0_5, %c0_6], %26 {strides = array<i32>} : memref<25x128xf32, #tpu.memory_space<vmem>>, vector<25x128xf32>,
    return
  }
  func.func @transform_0(%arg0: i32) -> (i32, i32) {
    %c0_i32 = arith.constant 0 : i32
    %c0_i32_0 = arith.constant 0 : i32
    return %arg0, %c0_i32 : i32, i32
  }
  func.func @transform_1(%arg0: i32) -> (i32, i32) {
    %c0_i32 = arith.constant 0 : i32
    %c0_i32_0 = arith.constant 0 : i32
    %c0_i32_1 = arith.constant 0 : i32
    return %c0_i32, %c0_i32_0 : i32, i32
  }
  func.func @transform_2(%arg0: i32) -> (i32, i32) {
    %c0_i32 = arith.constant 0 : i32
    %c0_i32_0 = arith.constant 0 : i32
    return %arg0, %c0_i32 : i32, i32
  }
}

</mosaic_0001>

<llo_original>
// kernel: tpu_custom_call.1
$region0: #{tpu_custom_call.1}
  #allocation0 [shape = 'u32[]', space=smem, size = 0x4, offset = 0x4, fixed_abs, tag = 'smem constant byte address 0x4 - core index']
  #allocation1 [shape = 'u32[144,128]{1,0:T(1,128)}', space=vmem, size = 0x12000, scoped, tag = 'internal scratch']
  %s0 = inlined_call_operand.vmem [shape: f32[25,4], index: 0, kind: input, shape index: {}]
  %s1 = inlined_call_operand.vmem [shape: f32[3,128], index: 1, kind: input, shape index: {}]
  %s2 = inlined_call_operand.hbm [shape: f32[25,128], index: 2, kind: output, shape index: {}]
  %s3 = sld [smem:[#allocation0]]
  $region18: #{tpu_custom_call.1} parent=0
    _
  %s5 = ssub.s32 1, %s3
  %s6 = scalar_select 0, %s5, %s3
  $region1: #{tpu_custom_call.1} parent=0
    #allocation2 [shape = 'u8[16384]{0}', space=vmem, size = 0x4000, scoped, tag = 'output window, operand 0, single buffered']
    #allocation3 [shape = 's32[1]{0}', space=sflag, size = 0x4, scoped, tag = 'scoped memory for tpu_custom_call.1']
    %7 = vsyncpa [#allocation3], 0
    // Predicated region
    $region2: #{tpu_custom_call.1} parent=1 // pred_check
      _
    $region3: #{tpu_custom_call.1} parent=1 // pred_check_branch
      %9 = sbr.rel (0) target = $region5
    $region4: #{tpu_custom_call.1} parent=1 // pred_region
      _
    $region5: #{tpu_custom_call.1} parent=1 // pred_fallthru
      _
    // Predicated region
    $region6: #{tpu_custom_call.1} parent=1 // pred_check
      _
    $region7: #{tpu_custom_call.1} parent=1 // pred_check_branch
      %11 = sbr.rel (0) target = $region9
    $region8: #{tpu_custom_call.1} parent=1 // pred_region
      _
    $region9: #{tpu_custom_call.1} parent=1 // pred_fallthru
      _
    %v12 = vld [vmem:[%s0] sm:$0xff]
    %v13 = vld [vmem:[%s0 + $0x8] sm:$0xff]
    %v14 = vld [vmem:[%s0 + $0x10] sm:$0xff]
    %v15 = vld [vmem:[%s0 + $0x18] sm:$0x1]
    %17 = vset.pattern.permute.xlu0 0
    %18 = vperm.xlu0 %17, %v12
    %v19 = vpop.permute.xlu0 %18
    %22 = vset.pattern.permute.xlu0 0
    %23 = vperm.xlu0 %22, %v13
    %v24 = vpop.permute.xlu0 %23
    %27 = vset.pattern.permute.xlu0 0
    %28 = vperm.xlu0 %27, %v14
    %v29 = vpop.permute.xlu0 %28
    %32 = vset.pattern.permute.xlu0 0
    %33 = vperm.xlu0 %32, %v15
    %v34 = vpop.permute.xlu0 %33
    %36 = vset.pattern.permute.xlu0 1
    %37 = vperm.xlu0 %36, %v12
    %v38 = vpop.permute.xlu0 %37
    %40 = vset.pattern.permute.xlu0 1
    %41 = vperm.xlu0 %40, %v13
    %v42 = vpop.permute.xlu0 %41
    %44 = vset.pattern.permute.xlu0 1
    %45 = vperm.xlu0 %44, %v14
    %v46 = vpop.permute.xlu0 %45
    %48 = vset.pattern.permute.xlu0 1
    %49 = vperm.xlu0 %48, %v15
    %v50 = vpop.permute.xlu0 %49
    %52 = vset.pattern.permute.xlu0 2
    %53 = vperm.xlu0 %52, %v12
    %v54 = vpop.permute.xlu0 %53
    %56 = vset.pattern.permute.xlu0 2
    %57 = vperm.xlu0 %56, %v13
    %v58 = vpop.permute.xlu0 %57
    %60 = vset.pattern.permute.xlu0 2
    %61 = vperm.xlu0 %60, %v14
    %v62 = vpop.permute.xlu0 %61
    %64 = vset.pattern.permute.xlu0 2
    %65 = vperm.xlu0 %64, %v15
    %v66 = vpop.permute.xlu0 %65
    %68 = vset.pattern.permute.xlu0 3
    %69 = vperm.xlu0 %68, %v12
    %v70 = vpop.permute.xlu0 %69
    %72 = vset.pattern.permute.xlu0 3
    %73 = vperm.xlu0 %72, %v13
    %v74 = vpop.permute.xlu0 %73
    %76 = vset.pattern.permute.xlu0 3
    %77 = vperm.xlu0 %76, %v14
    %v78 = vpop.permute.xlu0 %77
    %80 = vset.pattern.permute.xlu0 3
    %81 = vperm.xlu0 %80, %v15
    %v82 = vpop.permute.xlu0 %81
    %vm84 = vcmask 261120
    %v85 = vsel %vm84, %v19, %v38
    %v86 = vsel %vm84, %v24, %v42
    %v87 = vsel %vm84, %v29, %v46
    %v88 = vsel %vm84, %v34, %v50
    %vm89 = vcmask 523264
    %v90 = vsel %vm89, %v85, %v54
    %v91 = vsel %vm89, %v86, %v58
    %v92 = vsel %vm89, %v87, %v62
    %v93 = vsel %vm89, %v88, %v66
    %vm94 = vcmask 785408
    %v95 = vsel %vm94, %v90, %v70
    %v96 = vsel %vm94, %v91, %v74
    %v97 = vsel %vm94, %v92, %v78
    %v98 = vsel %vm94, %v93, %v82
    %v99 = vld [vmem:[%s1] sm:$0x1]
    %v100 = vlaneseq
    %v101 = vshrl.u32 %v100, 7
    %v102 = vsub.s32 0, %v101
    %v103 = vrot.slane %v99, %v102
    %v104 = vmul.f32 %v95, %v103
    %v105 = vmul.f32 %v96, %v103
    %v106 = vmul.f32 %v97, %v103
    %v107 = vmul.f32 %v98, %v103
    %v108 = vld [vmem:[%s1 + $0x1] sm:$0x1]
    %v109 = vlaneseq
    %v110 = vshrl.u32 %v109, 7
    %v111 = vsub.s32 0, %v110
    %v112 = vrot.slane %v108, %v111
    %v113 = vadd.f32 %v104, %v112
    %v114 = vadd.f32 %v105, %v112
    %v115 = vadd.f32 %v106, %v112
    %v116 = vadd.f32 %v107, %v112
    %v117 = vand.u32 2147483647, %v113
    %vm118 = vcmp.le.f32.partialorder %v117, 0.7853982
    %vm119 = vcmp.lt.s32.totalorder %v113, 0
    %v120 = vand.u32 %v113, 2139095040
    %v121 = vshrl.u32 %v120, 23
    %v122 = vsub.s32 %v121, 127
    %v123 = vand.u32 2147483647, %v113
    %v124 = vand.u32 %v123, 8388607
    %v125 = vor.u32 %v124, 8388608
    %v126 = vsub.s32 0, %v125
    %v127 = vadd.s32 %v122, 1
    %vm128 = vcmp.gt.s32.totalorder %v127, 0
    %v129 = vsel %vm128, %v127, 0
    %v130 = vshrl.u32 %v129, 5
    %v131 = vand.u32 %v129, 31
    %v132 = vsub.s32 32, %v131
    %v133 = vshrl.u32 683565275, %v132
    %v134 = vshll.u32 683565275, %v131
    %v135 = vshrl.u32 2475754826, %v132
    %v136 = vor.u32 %v134, %v135
    %v137 = vshll.u32 2475754826, %v131
    %v138 = vshrl.u32 2131351028, %v132
    %v139 = vor.u32 %v137, %v138
    %v140 = vshll.u32 2131351028, %v131
    %v141 = vshrl.u32 2102212464, %v132
    %v142 = vor.u32 %v140, %v141
    %v143 = vshll.u32 2102212464, %v131
    %v144 = vshrl.u32 920167782, %v132
    %v145 = vor.u32 %v143, %v144
    %v146 = vshll.u32 920167782, %v131
    %v147 = vshrl.u32 1326507024, %v132
    %v148 = vor.u32 %v146, %v147
    %vm149 = vcmp.lt.s32.totalorder %v130, 1
    %vm150 = vcmp.lt.s32.totalorder %v130, 2
    %vm151 = vcmp.lt.s32.totalorder %v130, 3
    %vm152 = vcmp.lt.s32.totalorder %v130, 4
    %v153 = vsel %vm149, %v133, %v136
    %v154 = vsel %vm152, %v142, 2102212464
    %v155 = vsel %vm151, %v139, %v154
    %v156 = vsel %vm150, %v153, %v155
    %v157 = vsel %vm149, %v136, %v139
    %v158 = vsel %vm152, %v145, 920167782
    %v159 = vsel %vm151, %v142, %v158
    %v160 = vsel %vm150, %v157, %v159
    %v161 = vsel %vm149, %v139, %v142
    %v162 = vsel %vm152, %v148, 1326507024
    %v163 = vsel %vm151, %v145, %v162
    %v164 = vsel %vm150, %v161, %v163
    %v165 = vshll.u32 %v125, 8
    %v166 = vmul.u32.u64.compose %v165, %v164
    %v167 = vextract.low.u32 %v166
    %v168 = vextract.high.u32 %v166
    %v169 = vmul.u32.u64.compose %v165, %v160
    %v170 = vextract.low.u32 %v169
    %v171 = vextract.high.u32 %v169
    %v172 = vmul.u32 %v165, %v156
    %v173 = vadd.s32 %v168, %v170
    %vm174 = vc.u32 %v168, %v170
    %v175 = vadd.s32 %v171, 1
    %v176 = vsel %vm174, %v175, %v171
    %v177 = vadd.s32 %v172, %v176
    %v178 = vadd.s32 %v177, 536870912
    %v179 = vshrl.u32 %v178, 30
    %v180 = vshll.u32 %v179, 30
    %v181 = vsub.s32 %v177, %v180
    %vm182 = vcmp.lt.s32.totalorder %v181, 0
    %v183 = vsub.s32 0, %v181
    %v184 = vsel %vm182, %v183, %v181
    %v185 = vclz %v184
    %v186 = vsub.s32 %v185, 2
    %vm187 = vcmp.gt.s32.totalorder 0, %v186
    %v188 = vsel %vm187, 0, %v186
    %v189 = vsub.s32 32, %v188
    %v190 = vshll.u32 %v181, %v188
    %v191 = vshrl.u32 %v173, %v189
    %v192 = vor.u32 %v190, %v191
    %v193 = vsub.s32 4294967266, %v188
    %v194 = vadd.s32 %v193, 127
    %v195 = vshll.u32 %v194, 23
    %v196 = vor.u32 4788187, %v195
    %v197 = vand.u32 2147483647, %v196
    %v199 = vcvt.s32.f32 %v192
    %v200 = vmul.f32 %v199, %v197
    %v201 = vxor.u32 %v200, 2147483648
    %v202 = vsel %vm119, %v201, %v200
    %v203 = vsub.s32 4, %v179
    %v204 = vsel %vm119, %v203, %v179
    %v205 = vsel %vm118, %v113, %v202
    %v206 = vsel %vm118, 0, %v204
    %v207 = vcosq.f32.pop %v205
    %v208 = vsinq.f32.pop %v205
    %vm209 = vweird.f32 %v113
    %v210 = vadd.s32 %v206, 3
    %v211 = vand.u32 %v210, 3
    %vm212 = vcmp.lt.s32.totalorder %v211, 2
    %vm213 = vcmp.eq.s32.totalorder %v211, 0
    %v214 = vxor.u32 %v208, 2147483648
    %v215 = vsel %vm213, %v207, %v214
    %vm216 = vcmp.eq.s32.totalorder %v211, 2
    %v217 = vxor.u32 %v207, 2147483648
    %v218 = vsel %vm216, %v217, %v208
    %v219 = vsel %vm212, %v215, %v218
    %v220 = vsel %vm209, nan, %v219
    %v221 = vand.u32 2147483647, %v114
    %vm222 = vcmp.le.f32.partialorder %v221, 0.7853982
    %vm223 = vcmp.lt.s32.totalorder %v114, 0
    %v224 = vand.u32 %v114, 2139095040
    %v225 = vshrl.u32 %v224, 23
    %v226 = vsub.s32 %v225, 127
    %v227 = vand.u32 2147483647, %v114
    %v228 = vand.u32 %v227, 8388607
    %v229 = vor.u32 %v228, 8388608
    %v230 = vsub.s32 0, %v229
    %v231 = vadd.s32 %v226, 1
    %vm232 = vcmp.gt.s32.totalorder %v231, 0
    %v233 = vsel %vm232, %v231, 0
    %v234 = vshrl.u32 %v233, 5
    %v235 = vand.u32 %v233, 31
    %v236 = vsub.s32 32, %v235
    %v237 = vshrl.u32 683565275, %v236
    %v238 = vshll.u32 683565275, %v235
    %v239 = vshrl.u32 2475754826, %v236
    %v240 = vor.u32 %v238, %v239
    %v241 = vshll.u32 2475754826, %v235
    %v242 = vshrl.u32 2131351028, %v236
    %v243 = vor.u32 %v241, %v242
    %v244 = vshll.u32 2131351028, %v235
    %v245 = vshrl.u32 2102212464, %v236
    %v246 = vor.u32 %v244, %v245
    %v247 = vshll.u32 2102212464, %v235
    %v248 = vshrl.u32 920167782, %v236
    %v249 = vor.u32 %v247, %v248
    %v250 = vshll.u32 920167782, %v235
    %v251 = vshrl.u32 1326507024, %v236
    %v252 = vor.u32 %v250, %v251
    %vm253 = vcmp.lt.s32.totalorder %v234, 1
    %vm254 = vcmp.lt.s32.totalorder %v234, 2
    %vm255 = vcmp.lt.s32.totalorder %v234, 3
    %vm256 = vcmp.lt.s32.totalorder %v234, 4
    %v257 = vsel %vm253, %v237, %v240
    %v258 = vsel %vm256, %v246, 2102212464
    %v259 = vsel %vm255, %v243, %v258
    %v260 = vsel %vm254, %v257, %v259
    %v261 = vsel %vm253, %v240, %v243
    %v262 = vsel %vm256, %v249, 920167782
    %v263 = vsel %vm255, %v246, %v262
    %v264 = vsel %vm254, %v261, %v263
    %v265 = vsel %vm253, %v243, %v246
    %v266 = vsel %vm256, %v252, 1326507024
    %v267 = vsel %vm255, %v249, %v266
    %v268 = vsel %vm254, %v265, %v267
    %v269 = vshll.u32 %v229, 8
    %v270 = vmul.u32.u64.compose %v269, %v268
    %v271 = vextract.low.u32 %v270
    %v272 = vextract.high.u32 %v270
    %v273 = vmul.u32.u64.compose %v269, %v264
    %v274 = vextract.low.u32 %v273
    %v275 = vextract.high.u32 %v273
    %v276 = vmul.u32 %v269, %v260
    %v277 = vadd.s32 %v272, %v274
    %vm278 = vc.u32 %v272, %v274
    %v279 = vadd.s32 %v275, 1
    %v280 = vsel %vm278, %v279, %v275
    %v281 = vadd.s32 %v276, %v280
    %v282 = vadd.s32 %v281, 536870912
    %v283 = vshrl.u32 %v282, 30
    %v284 = vshll.u32 %v283, 30
    %v285 = vsub.s32 %v281, %v284
    %vm286 = vcmp.lt.s32.totalorder %v285, 0
    %v287 = vsub.s32 0, %v285
    %v288 = vsel %vm286, %v287, %v285
    %v289 = vclz %v288
    %v290 = vsub.s32 %v289, 2
    %vm291 = vcmp.gt.s32.totalorder 0, %v290
    %v292 = vsel %vm291, 0, %v290
    %v293 = vsub.s32 32, %v292
    %v294 = vshll.u32 %v285, %v292
    %v295 = vshrl.u32 %v277, %v293
    %v296 = vor.u32 %v294, %v295
    %v297 = vsub.s32 4294967266, %v292
    %v298 = vadd.s32 %v297, 127
    %v299 = vshll.u32 %v298, 23
    %v300 = vor.u32 4788187, %v299
    %v301 = vand.u32 2147483647, %v300
    %v303 = vcvt.s32.f32 %v296
    %v304 = vmul.f32 %v303, %v301
    %v305 = vxor.u32 %v304, 2147483648
    %v306 = vsel %vm223, %v305, %v304
    %v307 = vsub.s32 4, %v283
    %v308 = vsel %vm223, %v307, %v283
    %v309 = vsel %vm222, %v114, %v306
    %v310 = vsel %vm222, 0, %v308
    %v311 = vcosq.f32.pop %v309
    %v312 = vsinq.f32.pop %v309
    %vm313 = vweird.f32 %v114
    %v314 = vadd.s32 %v310, 3
    %v315 = vand.u32 %v314, 3
    %vm316 = vcmp.lt.s32.totalorder %v315, 2
    %vm317 = vcmp.eq.s32.totalorder %v315, 0
    %v318 = vxor.u32 %v312, 2147483648
    %v319 = vsel %vm317, %v311, %v318
    %vm320 = vcmp.eq.s32.totalorder %v315, 2
    %v321 = vxor.u32 %v311, 2147483648
    %v322 = vsel %vm320, %v321, %v312
    %v323 = vsel %vm316, %v319, %v322
    %v324 = vsel %vm313, nan, %v323
    %v325 = vand.u32 2147483647, %v115
    %vm326 = vcmp.le.f32.partialorder %v325, 0.7853982
    %vm327 = vcmp.lt.s32.totalorder %v115, 0
    %v328 = vand.u32 %v115, 2139095040
    %v329 = vshrl.u32 %v328, 23
    %v330 = vsub.s32 %v329, 127
    %v331 = vand.u32 2147483647, %v115
    %v332 = vand.u32 %v331, 8388607
    %v333 = vor.u32 %v332, 8388608
    %v334 = vsub.s32 0, %v333
    %v335 = vadd.s32 %v330, 1
    %vm336 = vcmp.gt.s32.totalorder %v335, 0
    %v337 = vsel %vm336, %v335, 0
    %v338 = vshrl.u32 %v337, 5
    %v339 = vand.u32 %v337, 31
    %v340 = vsub.s32 32, %v339
    %v341 = vshrl.u32 683565275, %v340
    %v342 = vshll.u32 683565275, %v339
    %v343 = vshrl.u32 2475754826, %v340
    %v344 = vor.u32 %v342, %v343
    %v345 = vshll.u32 2475754826, %v339
    %v346 = vshrl.u32 2131351028, %v340
    %v347 = vor.u32 %v345, %v346
    %v348 = vshll.u32 2131351028, %v339
    %v349 = vshrl.u32 2102212464, %v340
    %v350 = vor.u32 %v348, %v349
    %v351 = vshll.u32 2102212464, %v339
    %v352 = vshrl.u32 920167782, %v340
    %v353 = vor.u32 %v351, %v352
    %v354 = vshll.u32 920167782, %v339
    %v355 = vshrl.u32 1326507024, %v340
    %v356 = vor.u32 %v354, %v355
    %vm357 = vcmp.lt.s32.totalorder %v338, 1
    %vm358 = vcmp.lt.s32.totalorder %v338, 2
    %vm359 = vcmp.lt.s32.totalorder %v338, 3
    %vm360 = vcmp.lt.s32.totalorder %v338, 4
    %v361 = vsel %vm357, %v341, %v344
    %v362 = vsel %vm360, %v350, 2102212464
    %v363 = vsel %vm359, %v347, %v362
    %v364 = vsel %vm358, %v361, %v363
    %v365 = vsel %vm357, %v344, %v347
    %v366 = vsel %vm360, %v353, 920167782
    %v367 = vsel %vm359, %v350, %v366
    %v368 = vsel %vm358, %v365, %v367
    %v369 = vsel %vm357, %v347, %v350
    %v370 = vsel %vm360, %v356, 1326507024
    %v371 = vsel %vm359, %v353, %v370
    %v372 = vsel %vm358, %v369, %v371
    %v373 = vshll.u32 %v333, 8
    %v374 = vmul.u32.u64.compose %v373, %v372
    %v375 = vextract.low.u32 %v374
    %v376 = vextract.high.u32 %v374
    %v377 = vmul.u32.u64.compose %v373, %v368
    %v378 = vextract.low.u32 %v377
    %v379 = vextract.high.u32 %v377
    %v380 = vmul.u32 %v373, %v364
    %v381 = vadd.s32 %v376, %v378
    %vm382 = vc.u32 %v376, %v378
    %v383 = vadd.s32 %v379, 1
    %v384 = vsel %vm382, %v383, %v379
    %v385 = vadd.s32 %v380, %v384
    %v386 = vadd.s32 %v385, 536870912
    %v387 = vshrl.u32 %v386, 30
    %v388 = vshll.u32 %v387, 30
    %v389 = vsub.s32 %v385, %v388
    %vm390 = vcmp.lt.s32.totalorder %v389, 0
    %v391 = vsub.s32 0, %v389
    %v392 = vsel %vm390, %v391, %v389
    %v393 = vclz %v392
    %v394 = vsub.s32 %v393, 2
    %vm395 = vcmp.gt.s32.totalorder 0, %v394
    %v396 = vsel %vm395, 0, %v394
    %v397 = vsub.s32 32, %v396
    %v398 = vshll.u32 %v389, %v396
    %v399 = vshrl.u32 %v381, %v397
    %v400 = vor.u32 %v398, %v399
    %v401 = vsub.s32 4294967266, %v396
    %v402 = vadd.s32 %v401, 127
    %v403 = vshll.u32 %v402, 23
    %v404 = vor.u32 4788187, %v403
    %v405 = vand.u32 2147483647, %v404
    %v407 = vcvt.s32.f32 %v400
    %v408 = vmul.f32 %v407, %v405
    %v409 = vxor.u32 %v408, 2147483648
    %v410 = vsel %vm327, %v409, %v408
    %v411 = vsub.s32 4, %v387
    %v412 = vsel %vm327, %v411, %v387
    %v413 = vsel %vm326, %v115, %v410
    %v414 = vsel %vm326, 0, %v412
    %v415 = vcosq.f32.pop %v413
    %v416 = vsinq.f32.pop %v413
    %vm417 = vweird.f32 %v115
    %v418 = vadd.s32 %v414, 3
    %v419 = vand.u32 %v418, 3
    %vm420 = vcmp.lt.s32.totalorder %v419, 2
    %vm421 = vcmp.eq.s32.totalorder %v419, 0
    %v422 = vxor.u32 %v416, 2147483648
    %v423 = vsel %vm421, %v415, %v422
    %vm424 = vcmp.eq.s32.totalorder %v419, 2
    %v425 = vxor.u32 %v415, 2147483648
    %v426 = vsel %vm424, %v425, %v416
    %v427 = vsel %vm420, %v423, %v426
    %v428 = vsel %vm417, nan, %v427
    %v429 = vand.u32 2147483647, %v116
    %vm430 = vcmp.le.f32.partialorder %v429, 0.7853982
    %vm431 = vcmp.lt.s32.totalorder %v116, 0
    %v432 = vand.u32 %v116, 2139095040
    %v433 = vshrl.u32 %v432, 23
    %v434 = vsub.s32 %v433, 127
    %v435 = vand.u32 2147483647, %v116
    %v436 = vand.u32 %v435, 8388607
    %v437 = vor.u32 %v436, 8388608
    %v438 = vsub.s32 0, %v437
    %v439 = vadd.s32 %v434, 1
    %vm440 = vcmp.gt.s32.totalorder %v439, 0
    %v441 = vsel %vm440, %v439, 0
    %v442 = vshrl.u32 %v441, 5
    %v443 = vand.u32 %v441, 31
    %v444 = vsub.s32 32, %v443
    %v445 = vshrl.u32 683565275, %v444
    %v446 = vshll.u32 683565275, %v443
    %v447 = vshrl.u32 2475754826, %v444
    %v448 = vor.u32 %v446, %v447
    %v449 = vshll.u32 2475754826, %v443
    %v450 = vshrl.u32 2131351028, %v444
    %v451 = vor.u32 %v449, %v450
    %v452 = vshll.u32 2131351028, %v443
    %v453 = vshrl.u32 2102212464, %v444
    %v454 = vor.u32 %v452, %v453
    %v455 = vshll.u32 2102212464, %v443
    %v456 = vshrl.u32 920167782, %v444
    %v457 = vor.u32 %v455, %v456
    %v458 = vshll.u32 920167782, %v443
    %v459 = vshrl.u32 1326507024, %v444
    %v460 = vor.u32 %v458, %v459
    %vm461 = vcmp.lt.s32.totalorder %v442, 1
    %vm462 = vcmp.lt.s32.totalorder %v442, 2
    %vm463 = vcmp.lt.s32.totalorder %v442, 3
    %vm464 = vcmp.lt.s32.totalorder %v442, 4
    %v465 = vsel %vm461, %v445, %v448
    %v466 = vsel %vm464, %v454, 2102212464
    %v467 = vsel %vm463, %v451, %v466
    %v468 = vsel %vm462, %v465, %v467
    %v469 = vsel %vm461, %v448, %v451
    %v470 = vsel %vm464, %v457, 920167782
    %v471 = vsel %vm463, %v454, %v470
    %v472 = vsel %vm462, %v469, %v471
    %v473 = vsel %vm461, %v451, %v454
    %v474 = vsel %vm464, %v460, 1326507024
    %v475 = vsel %vm463, %v457, %v474
    %v476 = vsel %vm462, %v473, %v475
    %v477 = vshll.u32 %v437, 8
    %v478 = vmul.u32.u64.compose %v477, %v476
    %v479 = vextract.low.u32 %v478
    %v480 = vextract.high.u32 %v478
    %v481 = vmul.u32.u64.compose %v477, %v472
    %v482 = vextract.low.u32 %v481
    %v483 = vextract.high.u32 %v481
    %v484 = vmul.u32 %v477, %v468
    %v485 = vadd.s32 %v480, %v482
    %vm486 = vc.u32 %v480, %v482
    %v487 = vadd.s32 %v483, 1
    %v488 = vsel %vm486, %v487, %v483
    %v489 = vadd.s32 %v484, %v488
    %v490 = vadd.s32 %v489, 536870912
    %v491 = vshrl.u32 %v490, 30
    %v492 = vshll.u32 %v491, 30
    %v493 = vsub.s32 %v489, %v492
    %vm494 = vcmp.lt.s32.totalorder %v493, 0
    %v495 = vsub.s32 0, %v493
    %v496 = vsel %vm494, %v495, %v493
    %v497 = vclz %v496
    %v498 = vsub.s32 %v497, 2
    %vm499 = vcmp.gt.s32.totalorder 0, %v498
    %v500 = vsel %vm499, 0, %v498
    %v501 = vsub.s32 32, %v500
    %v502 = vshll.u32 %v493, %v500
    %v503 = vshrl.u32 %v485, %v501
    %v504 = vor.u32 %v502, %v503
    %v505 = vsub.s32 4294967266, %v500
    %v506 = vadd.s32 %v505, 127
    %v507 = vshll.u32 %v506, 23
    %v508 = vor.u32 4788187, %v507
    %v509 = vand.u32 2147483647, %v508
    %v511 = vcvt.s32.f32 %v504
    %v512 = vmul.f32 %v511, %v509
    %v513 = vxor.u32 %v512, 2147483648
    %v514 = vsel %vm431, %v513, %v512
    %v515 = vsub.s32 4, %v491
    %v516 = vsel %vm431, %v515, %v491
    %v517 = vsel %vm430, %v116, %v514
    %v518 = vsel %vm430, 0, %v516
    %v519 = vcosq.f32.pop %v517
    %v520 = vsinq.f32.pop %v517
    %vm521 = vweird.f32 %v116
    %v522 = vadd.s32 %v518, 3
    %v523 = vand.u32 %v522, 3
    %vm524 = vcmp.lt.s32.totalorder %v523, 2
    %vm525 = vcmp.eq.s32.totalorder %v523, 0
    %v526 = vxor.u32 %v520, 2147483648
    %v527 = vsel %vm525, %v519, %v526
    %vm528 = vcmp.eq.s32.totalorder %v523, 2
    %v529 = vxor.u32 %v519, 2147483648
    %v530 = vsel %vm528, %v529, %v520
    %v531 = vsel %vm524, %v527, %v530
    %v532 = vsel %vm521, nan, %v531
    %v533 = vld [vmem:[%s1 + $0x2] sm:$0x1]
    %vm534 = vcmp.gt.f32.partialorder %v533, 0.5
    %v535 = vsel %vm534, 1, 0
    %v536 = vlaneseq
    %v537 = vshrl.u32 %v536, 7
    %v538 = vsub.s32 0, %v537
    %v539 = vrot.slane %v535, %v538
    %vm540 = vcmp.eq.s32.totalorder %v539, 1
    %v541 = vsel %vm540, %v220, %v113
    %v542 = vsel %vm540, %v324, %v114
    %v543 = vsel %vm540, %v428, %v115
    %v544 = vsel %vm540, %v532, %v116
    %545 = vst [vmem:[#allocation2] sm:$0xff] %v541
    %546 = vst [vmem:[#allocation2 + $0x8] sm:$0xff] %v542
    %547 = vst [vmem:[#allocation2 + $0x10] sm:$0xff] %v543
    %548 = vst [vmem:[#allocation2 + $0x18] sm:$0x1] %v544
    // Predicated region
    $region10: #{tpu_custom_call.1} parent=1 // pred_check
      _
    $region11: #{tpu_custom_call.1} parent=1 // pred_check_branch
      %550 = sbr.rel (0) target = $region13
    $region12: #{tpu_custom_call.1} parent=1 // pred_region
      %s552 = ssub.s32 512, 512
      %553 = vsyncadd [#allocation3], %s552
      %s554 = sshll.u32 [#allocation2], 4
      %s555 = int_to_ptr.vmem [resolvable:$true] %s554
      %560 = dma.vmem_to_hbm [thread:$0]  %s555, 512, %s2, [#allocation3], 128, 128, 8
    $region13: #{tpu_custom_call.1} parent=1 // pred_fallthru
      _
    // Predicated region
    $region14: #{tpu_custom_call.1} parent=1 // pred_check
      _
    $region15: #{tpu_custom_call.1} parent=1 // pred_check_branch
      %562 = sbr.rel (0) target = $region17
    $region16: #{tpu_custom_call.1} parent=1 // pred_region
      %563 = dma.done [#allocation3], 512
    $region17: #{tpu_custom_call.1} parent=1 // pred_fallthru
      _
    %564 = vsyncpa [#allocation3], 1

</llo_original>
